<compile_context>
chip_gen: v7x
topology: tpu7x:2x2x1
jax: 0.10.0
libtpu: 0.0.40
codegen_flags: <defaults>
</compile_context>

<pallas_src>
import functools

import jax
import jax.numpy as jnp
from jax.experimental import pallas as pl
from jax.experimental.pallas import tpu as pltpu


_VMEM_LIMIT_BYTES = 32 * 1024 * 1024          # explicit scoped-VMEM limit (all gens)
_VMEM_BUFFER_BUDGET = _VMEM_LIMIT_BYTES // 2  # what the tile sizing may consume
_DEFAULT_K_BLOCK = 512
_MAX_BATCH_BLOCK = 4096


def _round_up(x: int, m: int) -> int:
    return ((x + m - 1) // m) * m


def _cdiv(a: int, b: int) -> int:
    return (a + b - 1) // b


def _choose_batch_tiling(B: int, tb_cap: int, sublane: int):
    """Pick (TB, num_tiles, B_pad).

    TB is a multiple of `sublane`, at most ~tb_cap; >= 2 tiles whenever B allows
    (so v7x's 2 TensorCores both get work); padding overshoot stays tiny.
    """
    tb_cap = max(sublane, (tb_cap // sublane) * sublane)
    min_tiles = 2 if B >= 2 * sublane else 1
    nb = max(_cdiv(B, tb_cap), min_tiles)
    tb = _round_up(_cdiv(B, nb), sublane)
    nb = max(_cdiv(B, tb), min_tiles)
    return tb, nb, nb * tb


def _linear_sigmoid_kernel(x_ref, w_ref, b_ref, o_ref, *, precision):
    # x: (TB, F_in)  w: (F_in, F_out)  b: (1, F_out)  ->  o: (TB, F_out)
    z = jnp.dot(x_ref[...], w_ref[...],
                preferred_element_type=jnp.float32, precision=precision)
    z = z + b_ref[...]                      # bias broadcast over batch rows
    # exp lowers to the EUP slot; VALU only sees the add/select epilogue.
    o_ref[...] = jax.nn.sigmoid(z).astype(o_ref.dtype)


def _linear_sigmoid_ktiled_kernel(x_ref, w_ref, b_ref, o_ref, acc_ref, *, precision):
    # x: (TB, TK)  w: (TK, F_out)  b: (1, F_out)  acc: (TB, F_out) f32
    k = pl.program_id(1)

    @pl.when(k == 0)
    def _():
        acc_ref[...] = jnp.zeros_like(acc_ref)

    acc_ref[...] += jnp.dot(x_ref[...], w_ref[...],
                            preferred_element_type=jnp.float32,
                            precision=precision)

    @pl.when(k == pl.num_programs(1) - 1)
    def _():
        z = acc_ref[...] + b_ref[...]
        o_ref[...] = jax.nn.sigmoid(z).astype(o_ref.dtype)


def logistic_regression_forward(x, w_t, b, *, compute_dtype=None, k_block=None,
                                max_batch_block=_MAX_BATCH_BLOCK, precision=None):
    """sigmoid(x @ w_t + b).

    x: [B, F_in], w_t: [F_in, F_out] (transposed nn.Linear weight), b: [F_out].
    compute_dtype: dtype for the streamed x / w_t operands (e.g. jnp.bfloat16
        to halve HBM traffic); accumulation, bias add and sigmoid stay float32.
    k_block: force the K-tiled path with this reduction block (multiple of 128);
        None -> chosen automatically from the VMEM budget.
    """
    orig_dtype = x.dtype
    B, F_in = x.shape
    F_in_w, F_out = w_t.shape
    assert F_in_w == F_in, "w_t must be the [F_in, F_out] transpose of the nn.Linear weight"
    assert b.shape == (F_out,)

    compute_dtype = jnp.dtype(compute_dtype) if compute_dtype is not None else jnp.dtype(orig_dtype)
    in_sz = compute_dtype.itemsize
    out_sz = jnp.dtype(orig_dtype).itemsize
    sublane = max(8, 32 // max(in_sz, 1))   # 8 for f32, 16 for bf16 (packed sublanes)

    if x.dtype != compute_dtype:
        x = x.astype(compute_dtype)
    if w_t.dtype != compute_dtype:
        w_t = w_t.astype(compute_dtype)
    b2 = b.astype(jnp.float32).reshape(1, F_out)

    budget = _VMEM_BUFFER_BUDGET

    # Footprint of keeping the whole weight VMEM-resident (pipeline buffers x2).
    resident_w_bytes = 2 * F_in * F_out * in_sz
    use_k_tiling = (k_block is not None) or (resident_w_bytes > budget // 2)

    F_in_pad = F_in
    if not use_k_tiling:
        # ---- single-K path: whole weight resident, batch streamed ----------
        resident = resident_w_bytes + 2 * F_out * 4               # weight + bias
        per_row = 2 * (F_in * in_sz + F_out * out_sz)             # dbl-buffered x/out tiles
        tb_cap = max((budget - resident) // per_row, sublane)
        tb_cap = min(tb_cap, max_batch_block)
        TB, nb, B_pad = _choose_batch_tiling(B, tb_cap, sublane)

        grid = (nb,)
        in_specs = [
            # x tile marches down the batch; weight & bias stay VMEM-resident.
            pl.BlockSpec((TB, F_in), lambda i: (i, 0)),
            pl.BlockSpec((F_in, F_out), lambda i: (0, 0)),
            pl.BlockSpec((1, F_out), lambda i: (0, 0)),
        ]
        out_specs = pl.BlockSpec((TB, F_out), lambda i: (i, 0))
        scratch_shapes = []
        dimension_semantics = ("parallel",)
        kernel = functools.partial(_linear_sigmoid_kernel, precision=precision)
    else:
        # ---- K-tiled path: reduction axis tiled, f32 accumulator scratch ---
        TK = int(k_block) if k_block is not None else _DEFAULT_K_BLOCK
        TK = _round_up(min(TK, _round_up(F_in, 128)), 128)
        nk = _cdiv(F_in, TK)
        F_in_pad = nk * TK
        if F_in_pad != F_in:
            # Zero-padding the reduction dim is an exact no-op for the matmul.
            x = jnp.pad(x, ((0, 0), (0, F_in_pad - F_in)))
            w_t = jnp.pad(w_t, ((0, F_in_pad - F_in), (0, 0)))

        resident = 2 * F_out * 4 + 2 * TK * F_out * in_sz          # bias + streamed W tile
        per_row = 2 * TK * in_sz + 2 * F_out * out_sz + F_out * 4  # x + out tiles + acc
        tb_cap = max((budget - resident) // per_row, sublane)
        tb_cap = min(tb_cap, max_batch_block)
        TB, nb, B_pad = _choose_batch_tiling(B, tb_cap, sublane)

        grid = (nb, nk)                       # reduction axis last (innermost)
        in_specs = [
            pl.BlockSpec((TB, TK), lambda i, k: (i, k)),
            pl.BlockSpec((TK, F_out), lambda i, k: (k, 0)),
            pl.BlockSpec((1, F_out), lambda i, k: (0, 0)),
        ]
        out_specs = pl.BlockSpec((TB, F_out), lambda i, k: (i, 0))
        scratch_shapes = [pltpu.VMEM((TB, F_out), jnp.float32)]
        dimension_semantics = ("parallel", "arbitrary")
        kernel = functools.partial(_linear_sigmoid_ktiled_kernel, precision=precision)

    if B_pad != B:
        # Overshoot is < n_tiles * sublane rows by construction (no near-full
        # extra tile of wasted DMA/compute).
        x = jnp.pad(x, ((0, B_pad - B), (0, 0)))

    cost = pl.CostEstimate(
        flops=2 * B_pad * F_in_pad * F_out,
        transcendentals=B_pad * F_out,
        bytes_accessed=(B_pad * F_in_pad * in_sz + F_in_pad * F_out * in_sz
                        + F_out * 4 + B_pad * F_out * out_sz),
    )

    out_padded = pl.pallas_call(
        kernel,
        out_shape=jax.ShapeDtypeStruct((B_pad, F_out), orig_dtype),
        grid_spec=pltpu.PrefetchScalarGridSpec(
            num_scalar_prefetch=0,
            grid=grid,
            in_specs=in_specs,
            out_specs=out_specs,
            scratch_shapes=scratch_shapes,
        ),
        compiler_params=pltpu.CompilerParams(
            dimension_semantics=dimension_semantics,
            vmem_limit_bytes=_VMEM_LIMIT_BYTES),
        cost_estimate=cost,
    )(x, w_t, b2)

    return out_padded if B_pad == B else out_padded[:B]


if __name__ == "__main__":
    key = jax.random.PRNGKey(0)
    kx, kw, kb, kx2, kw2, kb2 = jax.random.split(key, 6)

    # ---- case 1: small logistic regression, f32, weight-resident path ------
    batch, input_feature, output_feature = 8, 32, 16
    bound = 1.0 / jnp.sqrt(jnp.float32(input_feature))
    # PyTorch nn.Linear weight is [out, in]; kernel uses its transpose [in, out].
    w = jax.random.uniform(kw, (output_feature, input_feature),
                           dtype=jnp.float32, minval=-bound, maxval=bound)
    b = jax.random.uniform(kb, (output_feature,),
                           dtype=jnp.float32, minval=-bound, maxval=bound)
    x = jax.random.normal(kx, (batch, input_feature), dtype=jnp.float32)

    y = jax.block_until_ready(logistic_regression_forward(x, w.T, b))
    y_ref = jax.nn.sigmoid(x @ w.T + b)
    assert y.shape == (batch, output_feature)
    assert jnp.allclose(y, y_ref, atol=1e-5, rtol=1e-5)

    # ---- case 2: same inputs, bf16-streamed operands, f32 accumulate -------
    y_bf16 = jax.block_until_ready(
        logistic_regression_forward(x, w.T, b, compute_dtype=jnp.bfloat16))
    assert y_bf16.shape == (batch, output_feature)
    assert y_bf16.dtype == y_ref.dtype
    assert jnp.allclose(y_bf16, y_ref, atol=2e-2, rtol=2e-2)

    # ---- case 3: wider features + ragged batch, forced K-tiled path --------
    batch2, in2, out2 = 24, 320, 16
    bound2 = 1.0 / jnp.sqrt(jnp.float32(in2))
    w2 = jax.random.uniform(kw2, (out2, in2), dtype=jnp.float32,
                            minval=-bound2, maxval=bound2)
    b2 = jax.random.uniform(kb2, (out2,), dtype=jnp.float32,
                            minval=-bound2, maxval=bound2)
    x2 = jax.random.normal(kx2, (batch2, in2), dtype=jnp.float32)

    y2 = jax.block_until_ready(
        logistic_regression_forward(x2, w2.T, b2, k_block=128))
    y2_ref = jax.nn.sigmoid(x2 @ w2.T + b2)
    assert y2.shape == (batch2, out2)
    assert jnp.allclose(y2, y2_ref, atol=2e-3, rtol=2e-3)

    print("KERNEL_OK")
</pallas_src>

<mosaic_0001>
module attributes {stable_mosaic.version = 11 : i64} {
  func.func @_linear_sigmoid_kernel(%arg0: i32, %arg1: memref<8x32xf32, #tpu.memory_space<vmem>>, %arg2: memref<32x16xf32, #tpu.memory_space<vmem>>, %arg3: memref<1x16xf32, #tpu.memory_space<vmem>>, %arg4: memref<8x16xf32, #tpu.memory_space<vmem>>) attributes {dimension_semantics = [#tpu.dimension_semantics<parallel>], iteration_bounds = array<i64: 1>, scalar_prefetch = 0 : i64, scratch_operands = 0 : i64, tpu.core_type = #tpu.core_type<tc>, window_params = [{transform_indices = @transform_0, window_bounds = array<i64: 8, 32>}, {pipeline_mode = #tpu.pipeline_mode<synchronous>, transform_indices = @transform_1, window_bounds = array<i64: 32, 16>}, {pipeline_mode = #tpu.pipeline_mode<synchronous>, transform_indices = @transform_2, window_bounds = array<i64: 1, 16>}, {transform_indices = @transform_3, window_bounds = array<i64: 8, 16>}]} {
    %c0 = arith.constant 0 : index
    %c0_0 = arith.constant 0 : index
    %0 = vector.load %arg1[%c0, %c0_0] : memref<8x32xf32, #tpu.memory_space<vmem>>, vector<8x32xf32>
    %c0_1 = arith.constant 0 : index
    %c0_2 = arith.constant 0 : index
    %1 = vector.load %arg2[%c0_1, %c0_2] : memref<32x16xf32, #tpu.memory_space<vmem>>, vector<32x16xf32>
    %cst = arith.constant dense<0.000000e+00> : vector<8x16xf32>
    %2 = tpu.matmul %0, %1, %cst {dimension_numbers = #tpu.dot_dimension_numbers<[1], [0], [0], [1], [0, 0, 1, 1], [], []>} : vector<8x32xf32>, vector<32x16xf32>, vector<8x16xf32> -> vector<8x16xf32>
    %c0_3 = arith.constant 0 : index
    %c0_4 = arith.constant 0 : index
    %3 = vector.load %arg3[%c0_3, %c0_4] : memref<1x16xf32, #tpu.memory_space<vmem>>, vector<1x16xf32>
    %4 = vector.broadcast %3 : vector<1x16xf32> to vector<8x16xf32>
    %5 = arith.addf %2, %4 : vector<8x16xf32>
    %6 = arith.negf %5 : vector<8x16xf32>
    %7 = math.exp %6 : vector<8x16xf32>
    %cst_5 = arith.constant 1.000000e+00 : f32
    %8 = vector.broadcast %cst_5 : f32 to vector<8x16xf32>
    %9 = arith.addf %8, %7 : vector<8x16xf32>
    %10 = arith.divf %8, %9 : vector<8x16xf32>
    %c0_6 = arith.constant 0 : index
    %c0_7 = arith.constant 0 : index
    %11 = vector.load %arg4[%c0_6, %c0_7] : memref<8x16xf32, #tpu.memory_space<vmem>>, vector<8x16xf32>
    tpu.vector_store %arg4[%c0_6, %c0_7], %10 {strides = array<i32>} : memref<8x16xf32, #tpu.memory_space<vmem>>, vector<8x16xf32>,
    return
  }
  func.func @transform_0(%arg0: i32) -> (i32, i32) {
    %c0_i32 = arith.constant 0 : i32
    %c0_i32_0 = arith.constant 0 : i32
    return %arg0, %c0_i32 : i32, i32
  }
  func.func @transform_1(%arg0: i32) -> (i32, i32) {
    %c0_i32 = arith.constant 0 : i32
    %c0_i32_0 = arith.constant 0 : i32
    %c0_i32_1 = arith.constant 0 : i32
    return %c0_i32, %c0_i32_0 : i32, i32
  }
  func.func @transform_2(%arg0: i32) -> (i32, i32) {
    %c0_i32 = arith.constant 0 : i32
    %c0_i32_0 = arith.constant 0 : i32
    %c0_i32_1 = arith.constant 0 : i32
    return %c0_i32, %c0_i32_0 : i32, i32
  }
  func.func @transform_3(%arg0: i32) -> (i32, i32) {
    %c0_i32 = arith.constant 0 : i32
    %c0_i32_0 = arith.constant 0 : i32
    return %arg0, %c0_i32 : i32, i32
  }
}

</mosaic_0001>

<llo_original>
// kernel: tpu_custom_call.1
$region0: #{tpu_custom_call.1}
  #allocation0 [shape = 'u32[]', space=smem, size = 0x4, offset = 0x4, fixed_abs, tag = 'smem constant byte address 0x4 - core index']
  #allocation1 [shape = 'u32[144,128]{1,0:T(1,128)}', space=vmem, size = 0x12000, scoped, tag = 'internal scratch']
  %s0 = inlined_call_operand.vmem [shape: f32[8,32], index: 0, kind: input, shape index: {}]
  %s1 = inlined_call_operand.vmem [shape: f32[32,16], index: 1, kind: input, shape index: {}]
  %s2 = inlined_call_operand.vmem [shape: f32[1,16], index: 2, kind: input, shape index: {}]
  %s3 = inlined_call_operand.hbm [shape: f32[8,16], index: 3, kind: output, shape index: {}]
  %s4 = sld [smem:[#allocation0]]
  $region22: #{tpu_custom_call.1} parent=0
    _
  %s6 = ssub.s32 1, %s4
  %s7 = scalar_select 0, %s6, %s4
  $region1: #{tpu_custom_call.1} parent=0
    #allocation2 [shape = 'u8[4096]{0}', space=vmem, size = 0x1000, scoped, tag = 'output window, operand 0, single buffered']
    #allocation3 [shape = 's32[1]{0}', space=sflag, size = 0x4, scoped, tag = 'scoped memory for tpu_custom_call.1']
    %8 = vsyncpa [#allocation3], 0
    // Predicated region
    $region2: #{tpu_custom_call.1} parent=1 // pred_check
      _
    $region3: #{tpu_custom_call.1} parent=1 // pred_check_branch
      %10 = sbr.rel (0) target = $region5
    $region4: #{tpu_custom_call.1} parent=1 // pred_region
      _
    $region5: #{tpu_custom_call.1} parent=1 // pred_fallthru
      _
    // Predicated region
    $region6: #{tpu_custom_call.1} parent=1 // pred_check
      _
    $region7: #{tpu_custom_call.1} parent=1 // pred_check_branch
      %12 = sbr.rel (0) target = $region9
    $region8: #{tpu_custom_call.1} parent=1 // pred_region
      _
    $region9: #{tpu_custom_call.1} parent=1 // pred_fallthru
      _
    // Predicated region
    $region10: #{tpu_custom_call.1} parent=1 // pred_check
      _
    $region11: #{tpu_custom_call.1} parent=1 // pred_check_branch
      %14 = sbr.rel (0) target = $region13
    $region12: #{tpu_custom_call.1} parent=1 // pred_region
      _
    $region13: #{tpu_custom_call.1} parent=1 // pred_fallthru
      _
    %v15 = vld [vmem:[%s0] sm:$0xff]
    %v16 = vld [vmem:[%s1] sm:$0xff]
    %v17 = vld [vmem:[%s1 + $0x8] sm:$0xff]
    %v18 = vld [vmem:[%s1 + $0x10] sm:$0xff]
    %v19 = vld [vmem:[%s1 + $0x18] sm:$0xff]
    %v20 = vld [vmem:[%s2] sm:$0x1]
    %v22 = vlaneseq
    %v23 = vshrl.u32 %v22, 7
    %v24 = vsub.s32 0, %v23
    %v25 = vrot.slane %v20, %v24
    %vm27 = vcmask 261120
    %v29 = vsel %vm27, %v15, 0
    %31 = vmatprep.subr.mxu0 0.0
    %32 = vmatpush1.msra.mxu0 %v16
    %33 = vmatprep.subr.mxu0 0.0
    %34 = vmatpush1.msra.mxu0 %v17
    %35 = vmatprep.subr.mxu0 0.0
    %36 = vmatpush1.msra.mxu0 %v18
    %37 = vmatprep.subr.mxu0 0.0
    %38 = vmatpush1.msra.mxu0 %v19
    %39 = vmatprep.subr.mxu0 0.0
    %40 = vmatpush1.msra.mxu0 0.0
    %41 = vmatprep.subr.mxu0 0.0
    %42 = vmatpush1.msra.mxu0 0.0
    %43 = vmatprep.subr.mxu0 0.0
    %44 = vmatpush1.msra.mxu0 0.0
    %45 = vmatprep.subr.mxu0 0.0
    %46 = vmatpush1.msra.mxu0 0.0
    %47 = vmatprep.subr.mxu0 0.0
    %48 = vmatpush1.msra.mxu0 0.0
    %49 = vmatprep.subr.mxu0 0.0
    %50 = vmatpush1.msra.mxu0 0.0
    %51 = vmatprep.subr.mxu0 0.0
    %52 = vmatpush1.msra.mxu0 0.0
    %53 = vmatprep.subr.mxu0 0.0
    %54 = vmatpush1.msra.mxu0 0.0
    %55 = vmatprep.subr.mxu0 0.0
    %56 = vmatpush1.msra.mxu0 0.0
    %57 = vmatprep.subr.mxu0 0.0
    %58 = vmatpush1.msra.mxu0 0.0
    %59 = vmatprep.subr.mxu0 0.0
    %60 = vmatpush1.msra.mxu0 0.0
    %61 = vmatprep.subr.mxu0 0.0
    %62 = vmatpush1.msra.mxu0 0.0
    %63 = vmatprep.subr.mxu0 0.0
    %64 = vmatpush1.msra.mxu0 0.0
    %65 = vmatprep.subr.mxu0 0.0
    %66 = vmatpush1.msra.mxu0 0.0
    %67 = vmatprep.subr.mxu0 0.0
    %68 = vmatpush1.msra.mxu0 0.0
    %69 = vmatprep.subr.mxu0 0.0
    %70 = vmatpush1.msra.mxu0 0.0
    %71 = vmatprep.subr.mxu0 0.0
    %72 = vmatpush1.msra.mxu0 0.0
    %73 = vmatprep.subr.mxu0 0.0
    %74 = vmatpush1.msra.mxu0 0.0
    %75 = vmatprep.subr.mxu0 0.0
    %76 = vmatpush1.msra.mxu0 0.0
    %77 = vmatprep.subr.mxu0 0.0
    %78 = vmatpush1.msra.mxu0 0.0
    %79 = vmatprep.subr.mxu0 0.0
    %80 = vmatpush1.msra.mxu0 0.0
    %81 = vmatprep.subr.mxu0 0.0
    %82 = vmatpush1.msra.mxu0 0.0
    %83 = vmatprep.subr.mxu0 0.0
    %84 = vmatpush1.msra.mxu0 0.0
    %85 = vmatprep.subr.mxu0 0.0
    %86 = vmatpush1.msra.mxu0 0.0
    %87 = vmatprep.subr.mxu0 0.0
    %88 = vmatpush1.msra.mxu0 0.0
    %89 = vmatprep.subr.mxu0 0.0
    %90 = vmatpush1.msra.mxu0 0.0
    %91 = vmatprep.subr.mxu0 0.0
    %92 = vmatpush1.msra.mxu0 0.0
    %93 = vmatprep.subr.mxu0 0.0
    %94 = vmatpush1.msra.mxu0 0.0
    %95 = vmatprep.mubr.f32.mxu0 0.0
    %96 = vmatmul.mubr.f32.gmra.mrb[0].mxu0 %v29
    %v97 = vpop.f32.mrb[0].mxu0
    %v98 = vadd.f32 %v25, %v97
    %v99 = vpop.f32.mrb[0].mxu0
    %100 = vdwg.mxu0
    %v101 = vxor.u32 %v98, 2147483648
    %v102 = vmul.f32 %v101, 1.442695
    %v103 = vpow.pop %v102
    %v104 = vadd.f32 %v103, 1.0
    %v105 = vrcp.pop %v104
    %v106 = vmul.f32 1.0, %v105
    %vm107 = vcmask 130048
    %108 = vst.msk [vmem:[#allocation2] sm:$0xff] %vm107, %v106
    // Predicated region
    $region14: #{tpu_custom_call.1} parent=1 // pred_check
      _
    $region15: #{tpu_custom_call.1} parent=1 // pred_check_branch
      %110 = sbr.rel (0) target = $region17
    $region16: #{tpu_custom_call.1} parent=1 // pred_region
      %s112 = ssub.s32 128, 128
      %113 = vsyncadd [#allocation3], %s112
      %s115 = sshll.u32 [#allocation2], 4
      %s116 = int_to_ptr.vmem [resolvable:$true] %s115
      %118 = dma.vmem_to_hbm [thread:$0]  %s116, 128, %s3, [#allocation3]
    $region17: #{tpu_custom_call.1} parent=1 // pred_fallthru
      _
    // Predicated region
    $region18: #{tpu_custom_call.1} parent=1 // pred_check
      _
    $region19: #{tpu_custom_call.1} parent=1 // pred_check_branch
      %120 = sbr.rel (0) target = $region21
    $region20: #{tpu_custom_call.1} parent=1 // pred_region
      %121 = dma.done [#allocation3], 128
    $region21: #{tpu_custom_call.1} parent=1 // pred_fallthru
      _
    %122 = vsyncpa [#allocation3], 1

</llo_original>
